<compile_context>
chip_gen: v7x
topology: tpu7x:2x2x1
jax: 0.10.0
libtpu: 0.0.40
codegen_flags: <defaults>
</compile_context>

<pallas_src>
import jax
import jax.numpy as jnp
from jax.experimental import pallas as pl
from jax.experimental.pallas import tpu as pltpu


def _cat_linear_kernel(l_ref, r_ref, wl_ref, wr_ref, b_ref, out_ref):
    # Both matmuls target the full (TB, out_l+out_r) accumulator; the zero
    # halves of the wide weights are effectively free (MXU pads K anyway) and
    # the output write is one dense, lane-aligned store.
    acc = jnp.dot(l_ref[...], wl_ref[...], preferred_element_type=jnp.float32)
    acc = acc + jnp.dot(r_ref[...], wr_ref[...],
                        preferred_element_type=jnp.float32)
    out_ref[...] = (acc + b_ref[...]).astype(out_ref.dtype)


def fuse_cat_linear_params(wl, bl, wr, br, dtype):
    """Init-time parameter fusion: wide (zero-padded) weights + fused bias."""
    in_l, out_l = wl.shape
    in_r, out_r = wr.shape
    wl_wide = jnp.concatenate(
        [wl, jnp.zeros((in_l, out_r), wl.dtype)], axis=1).astype(dtype)
    wr_wide = jnp.concatenate(
        [jnp.zeros((in_r, out_l), wr.dtype), wr], axis=1).astype(dtype)
    # Bias stays f32: it is added to the f32 MXU accumulator.
    b_fused = jnp.concatenate(
        [bl.reshape(1, out_l), br.reshape(1, out_r)], axis=1).astype(jnp.float32)
    return wl_wide, wr_wide, b_fused


def cat_layer(l, r, wl, bl, wr, br, *, block_b=1024, compute_dtype=None,
              out_dtype=None):
    """CatLayer forward: cat([l @ wl + bl, r @ wr + br], axis=1)."""
    B, in_l = l.shape
    in_r = r.shape[1]
    out_l, out_r = wl.shape[1], wr.shape[1]
    out_total = out_l + out_r

    compute_dtype = compute_dtype if compute_dtype is not None else l.dtype
    out_dtype = out_dtype if out_dtype is not None else compute_dtype

    # NOTE: in a real model this fusion happens once at parameter-init time,
    # not per forward call.
    wl_wide, wr_wide, b_fused = fuse_cat_linear_params(
        wl, bl, wr, br, dtype=compute_dtype)
    l = l.astype(compute_dtype)
    r = r.astype(compute_dtype)

    # Batch tile: large (amortize ~0.35us/step) but clamped to B.  If tb == B
    # the block equals the full array (the (8,128) rule does not apply);
    # otherwise tb is a multiple of 8 (and of 256 by default).
    tb = min(block_b, B)
    grid = (pl.cdiv(B, tb),)

    return pl.pallas_call(
        _cat_linear_kernel,
        out_shape=jax.ShapeDtypeStruct((B, out_total), out_dtype),
        grid=grid,
        in_specs=[
            pl.BlockSpec((tb, in_l), lambda i: (i, 0)),        # l tile
            pl.BlockSpec((tb, in_r), lambda i: (i, 0)),        # r tile
            pl.BlockSpec((in_l, out_total), lambda i: (0, 0)),  # resident Wl'
            pl.BlockSpec((in_r, out_total), lambda i: (0, 0)),  # resident Wr'
            pl.BlockSpec((1, out_total), lambda i: (0, 0)),     # fused bias
        ],
        out_specs=pl.BlockSpec((tb, out_total), lambda i: (i, 0)),
        compiler_params=pltpu.CompilerParams(
            dimension_semantics=("parallel",)),
    )(l, r, wl_wide, wr_wide, b_fused)


def _reference(l, r, wl, bl, wr, br):
    return jnp.concatenate(
        [l @ wl + bl.reshape(1, -1), r @ wr + br.reshape(1, -1)], axis=1)


if __name__ == "__main__":
    key = jax.random.PRNGKey(0)
    k1, k2, k3, k4, k5, k6 = jax.random.split(key, 6)

    B = 8
    in_left, out_left = 32, 64
    in_right, out_right = 16, 64

    # Deterministic inputs.
    l = jax.random.normal(k1, (B, in_left), dtype=jnp.float32)
    r = jax.random.normal(k2, (B, in_right), dtype=jnp.float32)

    # Deterministic parameters (nn.Linear shapes, stored transposed for matmul).
    wl = jax.random.normal(k3, (in_left, out_left), dtype=jnp.float32) * 0.1
    bl = jax.random.normal(k4, (1, out_left), dtype=jnp.float32) * 0.1
    wr = jax.random.normal(k5, (in_right, out_right), dtype=jnp.float32) * 0.1
    br = jax.random.normal(k6, (1, out_right), dtype=jnp.float32) * 0.1

    ref = _reference(l, r, wl, bl, wr, br)

    # 1) f32 path, single batch tile (B=8 == tb).
    out = cat_layer(l, r, wl, bl, wr, br)
    jax.block_until_ready(out)
    assert out.shape == (B, out_left + out_right), out.shape
    assert jnp.allclose(out, ref, atol=1e-5, rtol=1e-5), "f32 mismatch vs reference"

    # 2) bf16 compute path (f32 accumulation); perf-recommended for v5e/v6e/v7x.
    out_bf16 = cat_layer(l, r, wl, bl, wr, br, compute_dtype=jnp.bfloat16)
    jax.block_until_ready(out_bf16)
    assert out_bf16.dtype == jnp.bfloat16
    assert jnp.allclose(out_bf16.astype(jnp.float32), ref, atol=0.1, rtol=0.1), \
        "bf16 mismatch vs reference"

    # 3) Multi-step batch grid (exercises pipelining + parallel semantics).
    Bg = 256
    kg1, kg2 = jax.random.split(jax.random.PRNGKey(1))
    lg = jax.random.normal(kg1, (Bg, in_left), dtype=jnp.float32)
    rg = jax.random.normal(kg2, (Bg, in_right), dtype=jnp.float32)
    out_g = cat_layer(lg, rg, wl, bl, wr, br, block_b=128)
    jax.block_until_ready(out_g)
    ref_g = _reference(lg, rg, wl, bl, wr, br)
    assert out_g.shape == (Bg, out_left + out_right)
    assert jnp.allclose(out_g, ref_g, atol=1e-5, rtol=1e-5), "grid mismatch vs reference"

    print("KERNEL_OK")
</pallas_src>

<mosaic_0001>
module attributes {stable_mosaic.version = 11 : i64} {
  func.func @_cat_linear_kernel(%arg0: i32, %arg1: memref<8x32xf32, #tpu.memory_space<vmem>>, %arg2: memref<8x16xf32, #tpu.memory_space<vmem>>, %arg3: memref<32x128xf32, #tpu.memory_space<vmem>>, %arg4: memref<16x128xf32, #tpu.memory_space<vmem>>, %arg5: memref<1x128xf32, #tpu.memory_space<vmem>>, %arg6: memref<8x128xf32, #tpu.memory_space<vmem>>) attributes {dimension_semantics = [#tpu.dimension_semantics<parallel>], iteration_bounds = array<i64: 1>, scalar_prefetch = 0 : i64, scratch_operands = 0 : i64, tpu.core_type = #tpu.core_type<tc>, window_params = [{transform_indices = @transform_0, window_bounds = array<i64: 8, 32>}, {transform_indices = @transform_1, window_bounds = array<i64: 8, 16>}, {pipeline_mode = #tpu.pipeline_mode<synchronous>, transform_indices = @transform_2, window_bounds = array<i64: 32, 128>}, {pipeline_mode = #tpu.pipeline_mode<synchronous>, transform_indices = @transform_3, window_bounds = array<i64: 16, 128>}, {pipeline_mode = #tpu.pipeline_mode<synchronous>, transform_indices = @transform_4, window_bounds = array<i64: 1, 128>}, {transform_indices = @transform_5, window_bounds = array<i64: 8, 128>}]} {
    %c0 = arith.constant 0 : index
    %c0_0 = arith.constant 0 : index
    %0 = vector.load %arg1[%c0, %c0_0] : memref<8x32xf32, #tpu.memory_space<vmem>>, vector<8x32xf32>
    %c0_1 = arith.constant 0 : index
    %c0_2 = arith.constant 0 : index
    %1 = vector.load %arg3[%c0_1, %c0_2] : memref<32x128xf32, #tpu.memory_space<vmem>>, vector<32x128xf32>
    %cst = arith.constant dense<0.000000e+00> : vector<8x128xf32>
    %2 = tpu.matmul %0, %1, %cst {dimension_numbers = #tpu.dot_dimension_numbers<[1], [0], [0], [1], [0, 0, 1, 1], [], []>} : vector<8x32xf32>, vector<32x128xf32>, vector<8x128xf32> -> vector<8x128xf32>
    %c0_3 = arith.constant 0 : index
    %c0_4 = arith.constant 0 : index
    %3 = vector.load %arg2[%c0_3, %c0_4] : memref<8x16xf32, #tpu.memory_space<vmem>>, vector<8x16xf32>
    %c0_5 = arith.constant 0 : index
    %c0_6 = arith.constant 0 : index
    %4 = vector.load %arg4[%c0_5, %c0_6] : memref<16x128xf32, #tpu.memory_space<vmem>>, vector<16x128xf32>
    %cst_7 = arith.constant dense<0.000000e+00> : vector<8x128xf32>
    %5 = tpu.matmul %3, %4, %cst_7 {dimension_numbers = #tpu.dot_dimension_numbers<[1], [0], [0], [1], [0, 0, 1, 1], [], []>} : vector<8x16xf32>, vector<16x128xf32>, vector<8x128xf32> -> vector<8x128xf32>
    %6 = arith.addf %2, %5 : vector<8x128xf32>
    %c0_8 = arith.constant 0 : index
    %c0_9 = arith.constant 0 : index
    %7 = vector.load %arg5[%c0_8, %c0_9] : memref<1x128xf32, #tpu.memory_space<vmem>>, vector<1x128xf32>
    %8 = vector.broadcast %7 : vector<1x128xf32> to vector<8x128xf32>
    %9 = arith.addf %6, %8 : vector<8x128xf32>
    %c0_10 = arith.constant 0 : index
    %c0_11 = arith.constant 0 : index
    %10 = vector.load %arg6[%c0_10, %c0_11] : memref<8x128xf32, #tpu.memory_space<vmem>>, vector<8x128xf32>
    tpu.vector_store %arg6[%c0_10, %c0_11], %9 {strides = array<i32>} : memref<8x128xf32, #tpu.memory_space<vmem>>, vector<8x128xf32>,
    return
  }
  func.func @transform_0(%arg0: i32) -> (i32, i32) {
    %c0_i32 = arith.constant 0 : i32
    %c0_i32_0 = arith.constant 0 : i32
    return %arg0, %c0_i32 : i32, i32
  }
  func.func @transform_1(%arg0: i32) -> (i32, i32) {
    %c0_i32 = arith.constant 0 : i32
    %c0_i32_0 = arith.constant 0 : i32
    return %arg0, %c0_i32 : i32, i32
  }
  func.func @transform_2(%arg0: i32) -> (i32, i32) {
    %c0_i32 = arith.constant 0 : i32
    %c0_i32_0 = arith.constant 0 : i32
    %c0_i32_1 = arith.constant 0 : i32
    return %c0_i32, %c0_i32_0 : i32, i32
  }
  func.func @transform_3(%arg0: i32) -> (i32, i32) {
    %c0_i32 = arith.constant 0 : i32
    %c0_i32_0 = arith.constant 0 : i32
    %c0_i32_1 = arith.constant 0 : i32
    return %c0_i32, %c0_i32_0 : i32, i32
  }
  func.func @transform_4(%arg0: i32) -> (i32, i32) {
    %c0_i32 = arith.constant 0 : i32
    %c0_i32_0 = arith.constant 0 : i32
    %c0_i32_1 = arith.constant 0 : i32
    return %c0_i32, %c0_i32_0 : i32, i32
  }
  func.func @transform_5(%arg0: i32) -> (i32, i32) {
    %c0_i32 = arith.constant 0 : i32
    %c0_i32_0 = arith.constant 0 : i32
    return %arg0, %c0_i32 : i32, i32
  }
}

</mosaic_0001>

<llo_original>
// kernel: tpu_custom_call.1
$region0: #{tpu_custom_call.1}
  #allocation0 [shape = 'u32[]', space=smem, size = 0x4, offset = 0x4, fixed_abs, tag = 'smem constant byte address 0x4 - core index']
  #allocation1 [shape = 'u32[144,128]{1,0:T(1,128)}', space=vmem, size = 0x12000, scoped, tag = 'internal scratch']
  %s0 = inlined_call_operand.hbm [shape: f32[8,32], index: 0, kind: input, shape index: {}]
  %s1 = inlined_call_operand.hbm [shape: f32[8,16], index: 1, kind: input, shape index: {}]
  %s2 = inlined_call_operand.hbm [shape: f32[32,128], index: 2, kind: input, shape index: {}]
  %s3 = inlined_call_operand.hbm [shape: f32[16,128], index: 3, kind: input, shape index: {}]
  %s4 = inlined_call_operand.vmem [shape: f32[1,128], index: 4, kind: input, shape index: {}]
  %s5 = inlined_call_operand.hbm [shape: f32[8,128], index: 5, kind: output, shape index: {}]
  %s6 = sld [smem:[#allocation0]]
  $region46: #{tpu_custom_call.1} parent=0
    _
  %s8 = ssub.s32 1, %s6
  %s9 = scalar_select 0, %s8, %s6
  $region1: #{tpu_custom_call.1} parent=0
    #allocation2 [shape = 'u8[4096]{0}', space=vmem, size = 0x1000, scoped, tag = 'input window, operand 0, single buffered']
    #allocation3 [shape = 's32[1]{0}', space=sflag, size = 0x4, scoped, tag = 'scoped memory for tpu_custom_call.1']
    #allocation4 [shape = 's32[1]{0}', space=sflag, size = 0x4, scoped, tag = 'scoped memory for tpu_custom_call.1']
    #allocation5 [shape = 'u8[4096]{0}', space=vmem, size = 0x1000, scoped, tag = 'input window, operand 1, single buffered']
    #allocation6 [shape = 's32[1]{0}', space=sflag, size = 0x4, scoped, tag = 'scoped memory for tpu_custom_call.1']
    #allocation7 [shape = 'u8[16384]{0}', space=vmem, size = 0x4000, scoped, tag = 'input window, operand 2, single buffered']
    #allocation8 [shape = 'u8[8192]{0}', space=vmem, size = 0x2000, scoped, tag = 'input window, operand 3, single buffered']
    #allocation9 [shape = 's32[1]{0}', space=sflag, size = 0x4, scoped, tag = 'scoped memory for tpu_custom_call.1']
    #allocation10 [shape = 'u8[4096]{0}', space=vmem, size = 0x1000, scoped, tag = 'output window, operand 0, single buffered']
    %10 = vsyncpa [#allocation3], 0
    %11 = vsyncpa [#allocation6], 0
    %12 = vsyncpa [#allocation9], 0
    %13 = vsyncpa [#allocation4], 0
    // Predicated region
    $region2: #{tpu_custom_call.1} parent=1 // pred_check
      _
    $region3: #{tpu_custom_call.1} parent=1 // pred_check_branch
      %15 = sbr.rel (0) target = $region5
    $region4: #{tpu_custom_call.1} parent=1 // pred_region
      %s17 = ssub.s32 128, 128
      %18 = vsyncadd [#allocation3], %s17
      %s20 = sshll.u32 [#allocation2], 4
      %s21 = int_to_ptr.vmem [resolvable:$true] %s20
      %23 = dma.hbm_to_vmem [thread:$0]  %s0, 128, %s21, [#allocation3]
    $region5: #{tpu_custom_call.1} parent=1 // pred_fallthru
      _
    // Predicated region
    $region6: #{tpu_custom_call.1} parent=1 // pred_check
      _
    $region7: #{tpu_custom_call.1} parent=1 // pred_check_branch
      %25 = sbr.rel (0) target = $region9
    $region8: #{tpu_custom_call.1} parent=1 // pred_region
      %s27 = ssub.s32 128, 128
      %28 = vsyncadd [#allocation6], %s27
      %s30 = sshll.u32 [#allocation5], 4
      %s31 = int_to_ptr.vmem [resolvable:$true] %s30
      %33 = dma.hbm_to_vmem [thread:$0]  %s1, 128, %s31, [#allocation6]
    $region9: #{tpu_custom_call.1} parent=1 // pred_fallthru
      _
    // Predicated region
    $region10: #{tpu_custom_call.1} parent=1 // pred_check
      _
    $region11: #{tpu_custom_call.1} parent=1 // pred_check_branch
      %35 = sbr.rel (0) target = $region13
    $region12: #{tpu_custom_call.1} parent=1 // pred_region
      %s37 = ssub.s32 512, 512
      %38 = vsyncadd [#allocation6], %s37
      %s39 = sshll.u32 [#allocation7], 4
      %s40 = int_to_ptr.vmem [resolvable:$true] %s39
      %45 = dma.hbm_to_vmem [thread:$0]  %s2, 512, %s40, [#allocation6], 128, 128, 8
    $region13: #{tpu_custom_call.1} parent=1 // pred_fallthru
      _
    // Predicated region
    $region14: #{tpu_custom_call.1} parent=1 // pred_check
      _
    $region15: #{tpu_custom_call.1} parent=1 // pred_check_branch
      %47 = sbr.rel (0) target = $region17
    $region16: #{tpu_custom_call.1} parent=1 // pred_region
      %s49 = ssub.s32 256, 256
      %50 = vsyncadd [#allocation9], %s49
      %s51 = sshll.u32 [#allocation8], 4
      %s52 = int_to_ptr.vmem [resolvable:$true] %s51
      %57 = dma.hbm_to_vmem [thread:$0]  %s3, 256, %s52, [#allocation9], 128, 128, 8
    $region17: #{tpu_custom_call.1} parent=1 // pred_fallthru
      _
    // Predicated region
    $region18: #{tpu_custom_call.1} parent=1 // pred_check
      _
    $region19: #{tpu_custom_call.1} parent=1 // pred_check_branch
      %59 = sbr.rel (0) target = $region21
    $region20: #{tpu_custom_call.1} parent=1 // pred_region
      _
    $region21: #{tpu_custom_call.1} parent=1 // pred_fallthru
      _
    // Predicated region
    $region22: #{tpu_custom_call.1} parent=1 // pred_check
      _
    $region23: #{tpu_custom_call.1} parent=1 // pred_check_branch
      %61 = sbr.rel (0) target = $region25
    $region24: #{tpu_custom_call.1} parent=1 // pred_region
      %62 = dma.done [#allocation3], 128
    $region25: #{tpu_custom_call.1} parent=1 // pred_fallthru
      _
    // Predicated region
    $region26: #{tpu_custom_call.1} parent=1 // pred_check
      _
    $region27: #{tpu_custom_call.1} parent=1 // pred_check_branch
      %64 = sbr.rel (0) target = $region29
    $region28: #{tpu_custom_call.1} parent=1 // pred_region
      %65 = dma.done [#allocation6], 128
    $region29: #{tpu_custom_call.1} parent=1 // pred_fallthru
      _
    // Predicated region
    $region30: #{tpu_custom_call.1} parent=1 // pred_check
      _
    $region31: #{tpu_custom_call.1} parent=1 // pred_check_branch
      %67 = sbr.rel (0) target = $region33
    $region32: #{tpu_custom_call.1} parent=1 // pred_region
      %68 = dma.done [#allocation6], 512
    $region33: #{tpu_custom_call.1} parent=1 // pred_fallthru
      _
    // Predicated region
    $region34: #{tpu_custom_call.1} parent=1 // pred_check
      _
    $region35: #{tpu_custom_call.1} parent=1 // pred_check_branch
      %70 = sbr.rel (0) target = $region37
    $region36: #{tpu_custom_call.1} parent=1 // pred_region
      %71 = dma.done [#allocation9], 256
    $region37: #{tpu_custom_call.1} parent=1 // pred_fallthru
      _
    %v72 = vld [vmem:[#allocation2] sm:$0xff]
    %v73 = vld [vmem:[#allocation7] sm:$0xff]
    %v74 = vld [vmem:[#allocation7 + $0x8] sm:$0xff]
    %v75 = vld [vmem:[#allocation7 + $0x10] sm:$0xff]
    %v76 = vld [vmem:[#allocation7 + $0x18] sm:$0xff]
    %v77 = vld [vmem:[#allocation5] sm:$0xff]
    %v78 = vld [vmem:[#allocation8] sm:$0xff]
    %v79 = vld [vmem:[#allocation8 + $0x8] sm:$0xff]
    %vm80 = vcmask 130048
    %v82 = vsel %vm80, %v77, 0
    %84 = vmatprep.subr.mxu0 0.0
    %85 = vmatpush1.msra.mxu0 %v78
    %86 = vmatprep.subr.mxu0 0.0
    %87 = vmatpush1.msra.mxu0 %v79
    %88 = vmatprep.subr.mxu0 0.0
    %89 = vmatpush1.msra.mxu0 0.0
    %90 = vmatprep.subr.mxu0 0.0
    %91 = vmatpush1.msra.mxu0 0.0
    %92 = vmatprep.subr.mxu0 0.0
    %93 = vmatpush1.msra.mxu0 0.0
    %94 = vmatprep.subr.mxu0 0.0
    %95 = vmatpush1.msra.mxu0 0.0
    %96 = vmatprep.subr.mxu0 0.0
    %97 = vmatpush1.msra.mxu0 0.0
    %98 = vmatprep.subr.mxu0 0.0
    %99 = vmatpush1.msra.mxu0 0.0
    %100 = vmatprep.subr.mxu0 0.0
    %101 = vmatpush1.msra.mxu0 0.0
    %102 = vmatprep.subr.mxu0 0.0
    %103 = vmatpush1.msra.mxu0 0.0
    %104 = vmatprep.subr.mxu0 0.0
    %105 = vmatpush1.msra.mxu0 0.0
    %106 = vmatprep.subr.mxu0 0.0
    %107 = vmatpush1.msra.mxu0 0.0
    %108 = vmatprep.subr.mxu0 0.0
    %109 = vmatpush1.msra.mxu0 0.0
    %110 = vmatprep.subr.mxu0 0.0
    %111 = vmatpush1.msra.mxu0 0.0
    %112 = vmatprep.subr.mxu0 0.0
    %113 = vmatpush1.msra.mxu0 0.0
    %114 = vmatprep.subr.mxu0 0.0
    %115 = vmatpush1.msra.mxu0 0.0
    %116 = vmatprep.subr.mxu0 0.0
    %117 = vmatpush1.msra.mxu0 0.0
    %118 = vmatprep.subr.mxu0 0.0
    %119 = vmatpush1.msra.mxu0 0.0
    %120 = vmatprep.subr.mxu0 0.0
    %121 = vmatpush1.msra.mxu0 0.0
    %122 = vmatprep.subr.mxu0 0.0
    %123 = vmatpush1.msra.mxu0 0.0
    %124 = vmatprep.subr.mxu0 0.0
    %125 = vmatpush1.msra.mxu0 0.0
    %126 = vmatprep.subr.mxu0 0.0
    %127 = vmatpush1.msra.mxu0 0.0
    %128 = vmatprep.subr.mxu0 0.0
    %129 = vmatpush1.msra.mxu0 0.0
    %130 = vmatprep.subr.mxu0 0.0
    %131 = vmatpush1.msra.mxu0 0.0
    %132 = vmatprep.subr.mxu0 0.0
    %133 = vmatpush1.msra.mxu0 0.0
    %134 = vmatprep.subr.mxu0 0.0
    %135 = vmatpush1.msra.mxu0 0.0
    %136 = vmatprep.subr.mxu0 0.0
    %137 = vmatpush1.msra.mxu0 0.0
    %138 = vmatprep.subr.mxu0 0.0
    %139 = vmatpush1.msra.mxu0 0.0
    %140 = vmatprep.subr.mxu0 0.0
    %141 = vmatpush1.msra.mxu0 0.0
    %142 = vmatprep.subr.mxu0 0.0
    %143 = vmatpush1.msra.mxu0 0.0
    %144 = vmatprep.subr.mxu0 0.0
    %145 = vmatpush1.msra.mxu0 0.0
    %146 = vmatprep.subr.mxu0 0.0
    %147 = vmatpush1.msra.mxu0 0.0
    %148 = vmatprep.mubr.f32.mxu0 0.0
    %149 = vmatmul.mubr.f32.gmra.mrb[0].mxu0 %v82
    %v150 = vpop.f32.mrb[0].mxu0
    %v151 = vadd.f32 0.0, %v150
    %v152 = vpop.f32.mrb[0].mxu0
    %153 = vdwg.mxu0
    %vm154 = vcmask 261120
    %v156 = vsel %vm154, %v72, 0
    %158 = vmatprep.subr.mxu0 0.0
    %159 = vmatpush1.msra.mxu0 %v73
    %160 = vmatprep.subr.mxu0 0.0
    %161 = vmatpush1.msra.mxu0 %v74
    %162 = vmatprep.subr.mxu0 0.0
    %163 = vmatpush1.msra.mxu0 %v75
    %164 = vmatprep.subr.mxu0 0.0
    %165 = vmatpush1.msra.mxu0 %v76
    %166 = vmatprep.subr.mxu0 0.0
    %167 = vmatpush1.msra.mxu0 0.0
    %168 = vmatprep.subr.mxu0 0.0
    %169 = vmatpush1.msra.mxu0 0.0
    %170 = vmatprep.subr.mxu0 0.0
    %171 = vmatpush1.msra.mxu0 0.0
    %172 = vmatprep.subr.mxu0 0.0
    %173 = vmatpush1.msra.mxu0 0.0
    %174 = vmatprep.subr.mxu0 0.0
    %175 = vmatpush1.msra.mxu0 0.0
    %176 = vmatprep.subr.mxu0 0.0
    %177 = vmatpush1.msra.mxu0 0.0
    %178 = vmatprep.subr.mxu0 0.0
    %179 = vmatpush1.msra.mxu0 0.0
    %180 = vmatprep.subr.mxu0 0.0
    %181 = vmatpush1.msra.mxu0 0.0
    %182 = vmatprep.subr.mxu0 0.0
    %183 = vmatpush1.msra.mxu0 0.0
    %184 = vmatprep.subr.mxu0 0.0
    %185 = vmatpush1.msra.mxu0 0.0
    %186 = vmatprep.subr.mxu0 0.0
    %187 = vmatpush1.msra.mxu0 0.0
    %188 = vmatprep.subr.mxu0 0.0
    %189 = vmatpush1.msra.mxu0 0.0
    %190 = vmatprep.subr.mxu0 0.0
    %191 = vmatpush1.msra.mxu0 0.0
    %192 = vmatprep.subr.mxu0 0.0
    %193 = vmatpush1.msra.mxu0 0.0
    %194 = vmatprep.subr.mxu0 0.0
    %195 = vmatpush1.msra.mxu0 0.0
    %196 = vmatprep.subr.mxu0 0.0
    %197 = vmatpush1.msra.mxu0 0.0
    %198 = vmatprep.subr.mxu0 0.0
    %199 = vmatpush1.msra.mxu0 0.0
    %200 = vmatprep.subr.mxu0 0.0
    %201 = vmatpush1.msra.mxu0 0.0
    %202 = vmatprep.subr.mxu0 0.0
    %203 = vmatpush1.msra.mxu0 0.0
    %204 = vmatprep.subr.mxu0 0.0
    %205 = vmatpush1.msra.mxu0 0.0
    %206 = vmatprep.subr.mxu0 0.0
    %207 = vmatpush1.msra.mxu0 0.0
    %208 = vmatprep.subr.mxu0 0.0
    %209 = vmatpush1.msra.mxu0 0.0
    %210 = vmatprep.subr.mxu0 0.0
    %211 = vmatpush1.msra.mxu0 0.0
    %212 = vmatprep.subr.mxu0 0.0
    %213 = vmatpush1.msra.mxu0 0.0
    %214 = vmatprep.subr.mxu0 0.0
    %215 = vmatpush1.msra.mxu0 0.0
    %216 = vmatprep.subr.mxu0 0.0
    %217 = vmatpush1.msra.mxu0 0.0
    %218 = vmatprep.subr.mxu0 0.0
    %219 = vmatpush1.msra.mxu0 0.0
    %220 = vmatprep.subr.mxu0 0.0
    %221 = vmatpush1.msra.mxu0 0.0
    %222 = vmatprep.mubr.f32.mxu0 0.0
    %223 = vmatmul.mubr.f32.gmra.mrb[0].mxu0 %v156
    %v224 = vpop.f32.mrb[0].mxu0
    %v225 = vadd.f32 %v151, %v224
    %v226 = vpop.f32.mrb[0].mxu0
    %227 = vdwg.mxu0
    %v228 = vld [vmem:[%s4] sm:$0x1]
    %v230 = vlaneseq
    %v231 = vshrl.u32 %v230, 7
    %v232 = vsub.s32 0, %v231
    %v233 = vrot.slane %v228, %v232
    %v235 = vadd.f32 %v225, %v233
    %236 = vst [vmem:[#allocation10] sm:$0xff] %v235
    // Predicated region
    $region38: #{tpu_custom_call.1} parent=1 // pred_check
      _
    $region39: #{tpu_custom_call.1} parent=1 // pred_check_branch
      %238 = sbr.rel (0) target = $region41
    $region40: #{tpu_custom_call.1} parent=1 // pred_region
      %s240 = ssub.s32 128, 128
      %241 = vsyncadd [#allocation4], %s240
      %s243 = sshll.u32 [#allocation10], 4
      %s244 = int_to_ptr.vmem [resolvable:$true] %s243
      %246 = dma.vmem_to_hbm [thread:$0]  %s244, 128, %s5, [#allocation4]
    $region41: #{tpu_custom_call.1} parent=1 // pred_fallthru
      _
    // Predicated region
    $region42: #{tpu_custom_call.1} parent=1 // pred_check
      _
    $region43: #{tpu_custom_call.1} parent=1 // pred_check_branch
      %248 = sbr.rel (0) target = $region45
    $region44: #{tpu_custom_call.1} parent=1 // pred_region
      %249 = dma.done [#allocation4], 128
    $region45: #{tpu_custom_call.1} parent=1 // pred_fallthru
      _
    %250 = vsyncpa [#allocation3], 1
    %251 = vsyncpa [#allocation6], 1
    %252 = vsyncpa [#allocation9], 1
    %253 = vsyncpa [#allocation4], 1

</llo_original>
